<compile_context>
chip_gen: v7x
topology: tpu7x:2x2x1
jax: 0.10.0
libtpu: 0.0.40
codegen_flags: <defaults>
</compile_context>

<pallas_src>
import functools

import jax
import jax.numpy as jnp
from jax.experimental import pallas as pl
from jax.experimental.pallas import tpu as pltpu

_LANE = 128
_SUBLANE = 8


def _round_up(n, m):
    return ((n + m - 1) // m) * m


def _nbytes(shape, dtype):
    n = 1
    for s in shape:
        n *= int(s)
    return n * jnp.dtype(dtype).itemsize


def _is_v7x():
    """Best-effort chip detection (trace-time only; perf heuristic, not correctness)."""
    try:
        return "v7" in jax.devices()[0].device_kind.lower()
    except Exception:
        return False


def _rnn_seq_kernel(proj_ref, h0_ref, w_hh_ref, w_hy_ref, b_hy_ref,
                    y_ref, h_out_ref, h_carry, *, unroll):
    """U unrolled time steps of the recurrence. Grid = (batch_block, time_block)."""
    t = pl.program_id(1)

    # (Re)load the initial hidden state into the carry at the first time block
    # of every batch block.
    @pl.when(t == 0)
    def _():
        h_carry[...] = h0_ref[...]

    w_hh = w_hh_ref[...]      # (Hp, Hp), possibly bf16; VMEM-resident for all steps
    w_hy = w_hy_ref[...]      # (Hp, Yp)
    b_hy = b_hy_ref[...]      # (1, Yp); padded lanes hold -1e30

    # Static unroll over U time steps: constant indices, fully visible to the
    # LLO scheduler, so step u's output head can overlap step u+1's recurrence.
    for u in range(unroll):
        h = h_carry[...]                                     # f32 carry
        pre = jnp.dot(h.astype(w_hh.dtype), w_hh,
                      preferred_element_type=jnp.float32) + proj_ref[u]
        h_new = jnp.tanh(pre)                                # f32 elementwise (EUP)
        h_carry[...] = h_new
        h_out_ref[u] = h_new.astype(h_out_ref.dtype)

        # Output head: W_hy(new_state) -> log_softmax.  Padded logit lanes carry
        # a -1e30 bias so exp() == 0 and the softmax is unaffected.
        logits = jnp.dot(h_new.astype(w_hy.dtype), w_hy,
                         preferred_element_type=jnp.float32) + b_hy
        m = jnp.max(logits, axis=-1, keepdims=True)
        shifted = logits - m
        lse = jnp.log(jnp.sum(jnp.exp(shifted), axis=-1, keepdims=True))
        y_ref[u] = (shifted - lse).astype(y_ref.dtype)
        # TODO(synk): for vocab-sized y_size (Yp >> 512) tile this matmul +
        # log-softmax over Yp chunks (running max/sum) to bound vreg pressure.


@functools.partial(jax.jit, static_argnames=("mxu_dtype", "out_dtype", "unroll"))
def rnn_forward_seq(xs, h0, w_xh, b_xh, w_hh, b_hh, w_hy, b_hy, *,
                    mxu_dtype=jnp.bfloat16, out_dtype=jnp.float32, unroll=4):
    """Run the module's forward over a whole sequence with one recurrent pallas_call.

    xs: (T, B, x_size); h0: (B, h_size).
    Weights are in (in, out) layout (transposed nn.Linear), biases (1, out).
    Returns (log_probs (T, B, y_size), states (T, B, h_size)); states[t] is the
    `new_state` returned by the t-th call of the PyTorch module's forward.
    """
    T, B, x_size = xs.shape
    h_size = h0.shape[1]
    y_size = w_hy.shape[1]
    f32 = jnp.float32

    # ---- lane/sublane-dense padded sizes & block sizes -----------------------
    Hp = _round_up(h_size, _LANE)
    Yp = _round_up(y_size, _LANE)
    Bp = _round_up(B, _SUBLANE)
    b_blk = min(Bp, 256)                      # 256 rows fill the v6e/v7x MXU
    if _is_v7x() and Bp >= 2 * _SUBLANE:
        # Keep >= 2 batch blocks so the "parallel" axis feeds both v7x TCs.
        b_blk = min(b_blk, _round_up((Bp + 1) // 2, _SUBLANE))
    Bp = _round_up(Bp, b_blk)

    U = max(1, min(unroll, T))                # time steps per grid invocation
    Tp = _round_up(T, U)

    # ---- hoisted (non-recurrent) input projection ----------------------------
    # One big fully-parallel GEMM outside the serial recurrence:
    #   proj[t] = x_t @ W_xh + (b_xh + b_hh)
    proj = jnp.einsum("tbx,xh->tbh", xs.astype(f32), w_xh.astype(f32)) + (b_xh + b_hh)
    proj_p = jnp.zeros((Tp, Bp, Hp), f32).at[:T, :B, :h_size].set(proj)

    h0_p = jnp.zeros((Bp, Hp), f32).at[:B, :h_size].set(h0)

    w_hh_p = jnp.zeros((Hp, Hp), f32).at[:h_size, :h_size].set(w_hh)
    w_hy_p = jnp.zeros((Hp, Yp), f32).at[:h_size, :y_size].set(w_hy)
    b_hy_p = jnp.full((1, Yp), -1e30, f32).at[:, :y_size].set(b_hy)

    if mxu_dtype != jnp.float32:              # bf16 MXU operands; f32 accumulation
        w_hh_p = w_hh_p.astype(mxu_dtype)
        w_hy_p = w_hy_p.astype(mxu_dtype)

    # ---- VMEM budget (resident weights + double-buffered streams) ------------
    vmem_bytes = (
        2 * (_nbytes((Hp, Hp), w_hh_p.dtype) + _nbytes((Hp, Yp), w_hy_p.dtype)
             + _nbytes((1, Yp), f32) + _nbytes((b_blk, Hp), f32)
             + _nbytes((U, b_blk, Hp), f32)
             + _nbytes((U, b_blk, Yp), out_dtype)
             + _nbytes((U, b_blk, Hp), out_dtype))
        + _nbytes((b_blk, Hp), f32))
    vmem_limit = min(max(int(2.5 * vmem_bytes), 32 << 20), 128 << 20)

    grid = (Bp // b_blk, Tp // U)
    const = lambda shape: pl.BlockSpec(shape, lambda b, t: (0, 0))

    y_p, h_p = pl.pallas_call(
        functools.partial(_rnn_seq_kernel, unroll=U),
        out_shape=(
            jax.ShapeDtypeStruct((Tp, Bp, Yp), out_dtype),
            jax.ShapeDtypeStruct((Tp, Bp, Hp), out_dtype),
        ),
        grid_spec=pltpu.PrefetchScalarGridSpec(
            num_scalar_prefetch=0,
            grid=grid,
            in_specs=[
                pl.BlockSpec((U, b_blk, Hp), lambda b, t: (t, b, 0)),   # proj_t
                pl.BlockSpec((b_blk, Hp), lambda b, t: (b, 0)),         # h0
                const((Hp, Hp)),                                        # W_hh (resident)
                const((Hp, Yp)),                                        # W_hy (resident)
                const((1, Yp)),                                         # b_hy
            ],
            out_specs=(
                pl.BlockSpec((U, b_blk, Yp), lambda b, t: (t, b, 0)),   # log_probs
                pl.BlockSpec((U, b_blk, Hp), lambda b, t: (t, b, 0)),   # states
            ),
            scratch_shapes=[pltpu.VMEM((b_blk, Hp), f32)],              # hidden carry
        ),
        compiler_params=pltpu.CompilerParams(
            # Time must stay innermost + "arbitrary" (carried state); batch is
            # independent -> "parallel" (shards across v7x TensorCores).
            dimension_semantics=("parallel", "arbitrary"),
            vmem_limit_bytes=vmem_limit),
    )(proj_p, h0_p, w_hh_p, w_hy_p, b_hy_p)

    return y_p[:T, :B, :y_size], h_p[:T, :B, :h_size]


def rnn_forward(x, state, w_xh, b_xh, w_hh, b_hh, w_hy, b_hy, **kwargs):
    """Exact equivalent of the PyTorch module's single-step forward(x, state)."""
    ys, hs = rnn_forward_seq(x[None], state, w_xh, b_xh, w_hh, b_hh, w_hy, b_hy,
                             **kwargs)
    return ys[0], hs[0]


def init_linear_params(key, in_size, out_size):
    """nn.Linear-style init: U(-1/sqrt(in), 1/sqrt(in)); weight (in, out), bias (1, out)."""
    kw, kb = jax.random.split(key)
    bound = 1.0 / jnp.sqrt(jnp.float32(in_size))
    w = jax.random.uniform(kw, (in_size, out_size), jnp.float32, -bound, bound)
    b = jax.random.uniform(kb, (1, out_size), jnp.float32, -bound, bound)
    return w, b


if __name__ == "__main__":
    # Small shapes consistent with the module: x is (batch, x_size) per step.
    T, B, x_size, h_size, y_size = 8, 2, 16, 32, 8

    key = jax.random.PRNGKey(0)
    k_x, k_h, k_hh, k_xh, k_hy = jax.random.split(key, 5)

    xs = jax.random.normal(k_x, (T, B, x_size), jnp.float32)
    h0 = jax.random.normal(k_h, (B, h_size), jnp.float32) * 0.1  # init_state(std=0.1, B)

    w_hh, b_hh = init_linear_params(k_hh, h_size, h_size)
    w_xh, b_xh = init_linear_params(k_xh, x_size, h_size)
    w_hy, b_hy = init_linear_params(k_hy, h_size, y_size)

    # Pure-JAX reference: scan of the module's per-step forward.
    def step(h, x_t):
        h_new = jnp.tanh(h @ w_hh + b_hh + x_t @ w_xh + b_xh)
        y_t = jax.nn.log_softmax(h_new @ w_hy + b_hy, axis=-1)
        return h_new, (y_t, h_new)

    _, (ys_ref, hs_ref) = jax.lax.scan(step, h0, xs)

    # f32 MXU path, unroll=4 (T=8 -> 2 time grid steps: exercises the hidden
    # carry across grid invocations).
    y_all, h_all = rnn_forward_seq(xs, h0, w_xh, b_xh, w_hh, b_hh, w_hy, b_hy,
                                   mxu_dtype=jnp.float32, unroll=4)
    jax.block_until_ready((y_all, h_all))
    assert y_all.shape == (T, B, y_size) and h_all.shape == (T, B, h_size)
    assert jnp.allclose(y_all, ys_ref, atol=1e-4), "f32 log_softmax mismatch"
    assert jnp.allclose(h_all, hs_ref, atol=1e-4), "f32 state mismatch"

    # Ragged T (time padded up to a multiple of the unroll factor).
    T5 = 5
    y5, h5 = rnn_forward_seq(xs[:T5], h0, w_xh, b_xh, w_hh, b_hh, w_hy, b_hy,
                             mxu_dtype=jnp.float32, unroll=4)
    jax.block_until_ready((y5, h5))
    assert jnp.allclose(y5, ys_ref[:T5], atol=1e-4), "ragged-T log_softmax mismatch"
    assert jnp.allclose(h5, hs_ref[:T5], atol=1e-4), "ragged-T state mismatch"

    # Single-step path == module.forward(x, state).
    y1, h1 = rnn_forward(xs[0], h0, w_xh, b_xh, w_hh, b_hh, w_hy, b_hy,
                         mxu_dtype=jnp.float32)
    assert jnp.allclose(y1, ys_ref[0], atol=1e-4)
    assert jnp.allclose(h1, hs_ref[0], atol=1e-4)

    # Default path: bf16 MXU operands (f32 accumulation / activations).
    # Note: bf16 weight error compounds through the recurrence; tolerance is
    # only validated at this T.
    y_bf, h_bf = rnn_forward_seq(xs, h0, w_xh, b_xh, w_hh, b_hh, w_hy, b_hy)
    jax.block_until_ready((y_bf, h_bf))
    assert jnp.max(jnp.abs(y_bf - ys_ref)) < 0.1, "bf16 path drifted too far"
    assert jnp.max(jnp.abs(h_bf - hs_ref)) < 0.1, "bf16 path drifted too far"

    print("KERNEL_OK")
</pallas_src>

<mosaic_0001>
module attributes {stable_mosaic.version = 11 : i64} {
  func.func @_rnn_seq_kernel(%arg0: i32, %arg1: i32, %arg2: memref<4x8x128xf32, #tpu.memory_space<vmem>>, %arg3: memref<8x128xf32, #tpu.memory_space<vmem>>, %arg4: memref<128x128xf32, #tpu.memory_space<vmem>>, %arg5: memref<128x128xf32, #tpu.memory_space<vmem>>, %arg6: memref<1x128xf32, #tpu.memory_space<vmem>>, %arg7: memref<4x8x128xf32, #tpu.memory_space<vmem>>, %arg8: memref<4x8x128xf32, #tpu.memory_space<vmem>>, %arg9: memref<8x128xf32, #tpu.memory_space<vmem>>) attributes {dimension_semantics = [#tpu.dimension_semantics<parallel>, #tpu.dimension_semantics<arbitrary>], iteration_bounds = array<i64: 1, 2>, scalar_prefetch = 0 : i64, scratch_operands = 1 : i64, tpu.core_type = #tpu.core_type<tc>, window_params = [{transform_indices = @transform_0, window_bounds = array<i64: 4, 8, 128>}, {transform_indices = @transform_1, window_bounds = array<i64: 8, 128>}, {pipeline_mode = #tpu.pipeline_mode<synchronous>, transform_indices = @transform_2, window_bounds = array<i64: 128, 128>}, {pipeline_mode = #tpu.pipeline_mode<synchronous>, transform_indices = @transform_3, window_bounds = array<i64: 128, 128>}, {pipeline_mode = #tpu.pipeline_mode<synchronous>, transform_indices = @transform_4, window_bounds = array<i64: 1, 128>}, {transform_indices = @transform_5, window_bounds = array<i64: 4, 8, 128>}, {transform_indices = @transform_6, window_bounds = array<i64: 4, 8, 128>}]} {
    %c0_i32 = arith.constant 0 : i32
    %0 = arith.cmpi eq, %arg1, %c0_i32 : i32
    %1 = arith.extui %0 : i1 to i32
    %c0_i32_0 = arith.constant 0 : i32
    %2 = arith.cmpi ne, %1, %c0_i32_0 : i32
    scf.if %2 {
      %c0_70 = arith.constant 0 : index
      %c0_71 = arith.constant 0 : index
      %110 = vector.load %arg3[%c0_70, %c0_71] : memref<8x128xf32, #tpu.memory_space<vmem>>, vector<8x128xf32>
      %c0_72 = arith.constant 0 : index
      %c0_73 = arith.constant 0 : index
      %111 = vector.load %arg9[%c0_72, %c0_73] : memref<8x128xf32, #tpu.memory_space<vmem>>, vector<8x128xf32>
      tpu.vector_store %arg9[%c0_72, %c0_73], %110 {strides = array<i32>} : memref<8x128xf32, #tpu.memory_space<vmem>>, vector<8x128xf32>,
    } else {
    }
    %c0 = arith.constant 0 : index
    %c0_1 = arith.constant 0 : index
    %3 = vector.load %arg4[%c0, %c0_1] : memref<128x128xf32, #tpu.memory_space<vmem>>, vector<128x128xf32>
    %c0_2 = arith.constant 0 : index
    %c0_3 = arith.constant 0 : index
    %4 = vector.load %arg5[%c0_2, %c0_3] : memref<128x128xf32, #tpu.memory_space<vmem>>, vector<128x128xf32>
    %c0_4 = arith.constant 0 : index
    %c0_5 = arith.constant 0 : index
    %5 = vector.load %arg6[%c0_4, %c0_5] : memref<1x128xf32, #tpu.memory_space<vmem>>, vector<1x128xf32>
    %c0_6 = arith.constant 0 : index
    %c0_7 = arith.constant 0 : index
    %6 = vector.load %arg9[%c0_6, %c0_7] : memref<8x128xf32, #tpu.memory_space<vmem>>, vector<8x128xf32>
    %cst = arith.constant dense<0.000000e+00> : vector<8x128xf32>
    %7 = tpu.matmul %6, %3, %cst {dimension_numbers = #tpu.dot_dimension_numbers<[1], [0], [0], [1], [0, 0, 1, 1], [], []>} : vector<8x128xf32>, vector<128x128xf32>, vector<8x128xf32> -> vector<8x128xf32>
    %c0_8 = arith.constant 0 : index
    %c0_9 = arith.constant 0 : index
    %c0_10 = arith.constant 0 : index
    %8 = vector.load %arg2[%c0_8, %c0_9, %c0_10] : memref<4x8x128xf32, #tpu.memory_space<vmem>>, vector<1x8x128xf32>
    %9 = vector.shape_cast %8 : vector<1x8x128xf32> to vector<8x128xf32>
    %10 = arith.addf %7, %9 : vector<8x128xf32>
    %11 = math.tanh %10 : vector<8x128xf32>
    %c0_11 = arith.constant 0 : index
    %c0_12 = arith.constant 0 : index
    %12 = vector.load %arg9[%c0_11, %c0_12] : memref<8x128xf32, #tpu.memory_space<vmem>>, vector<8x128xf32>
    tpu.vector_store %arg9[%c0_11, %c0_12], %11 {strides = array<i32>} : memref<8x128xf32, #tpu.memory_space<vmem>>, vector<8x128xf32>,
    %c0_13 = arith.constant 0 : index
    %c0_14 = arith.constant 0 : index
    %c0_15 = arith.constant 0 : index
    %13 = vector.load %arg8[%c0_13, %c0_14, %c0_15] : memref<4x8x128xf32, #tpu.memory_space<vmem>>, vector<1x8x128xf32>
    %14 = vector.shape_cast %13 : vector<1x8x128xf32> to vector<8x128xf32>
    %15 = vector.shape_cast %11 : vector<8x128xf32> to vector<1x8x128xf32>
    tpu.vector_store %arg8[%c0_13, %c0_14, %c0_15], %15 {strides = array<i32>} : memref<4x8x128xf32, #tpu.memory_space<vmem>>, vector<1x8x128xf32>,
    %cst_16 = arith.constant dense<0.000000e+00> : vector<8x128xf32>
    %16 = tpu.matmul %11, %4, %cst_16 {dimension_numbers = #tpu.dot_dimension_numbers<[1], [0], [0], [1], [0, 0, 1, 1], [], []>} : vector<8x128xf32>, vector<128x128xf32>, vector<8x128xf32> -> vector<8x128xf32>
    %17 = vector.broadcast %5 : vector<1x128xf32> to vector<8x128xf32>
    %18 = arith.addf %16, %17 : vector<8x128xf32>
    %cst_17 = arith.constant dense<0xFF800000> : vector<8xf32>
    %19 = vector.multi_reduction <maximumf>, %18, %cst_17 [1] : vector<8x128xf32> to vector<8xf32>
    %20 = vector.shape_cast %19 : vector<8xf32> to vector<8x1xf32>
    %21 = vector.broadcast %20 : vector<8x1xf32> to vector<8x128xf32>
    %22 = arith.subf %18, %21 : vector<8x128xf32>
    %23 = math.exp %22 : vector<8x128xf32>
    %cst_18 = arith.constant dense<0.000000e+00> : vector<8xf32>
    %24 = vector.multi_reduction <add>, %23, %cst_18 [1] : vector<8x128xf32> to vector<8xf32>
    %25 = vector.shape_cast %24 : vector<8xf32> to vector<8x1xf32>
    %26 = math.log %25 : vector<8x1xf32>
    %27 = vector.broadcast %26 : vector<8x1xf32> to vector<8x128xf32>
    %28 = arith.subf %22, %27 : vector<8x128xf32>
    %c0_19 = arith.constant 0 : index
    %c0_20 = arith.constant 0 : index
    %c0_21 = arith.constant 0 : index
    %29 = vector.load %arg7[%c0_19, %c0_20, %c0_21] : memref<4x8x128xf32, #tpu.memory_space<vmem>>, vector<1x8x128xf32>
    %30 = vector.shape_cast %29 : vector<1x8x128xf32> to vector<8x128xf32>
    %31 = vector.shape_cast %28 : vector<8x128xf32> to vector<1x8x128xf32>
    tpu.vector_store %arg7[%c0_19, %c0_20, %c0_21], %31 {strides = array<i32>} : memref<4x8x128xf32, #tpu.memory_space<vmem>>, vector<1x8x128xf32>,
    %c0_22 = arith.constant 0 : index
    %c0_23 = arith.constant 0 : index
    %32 = vector.load %arg9[%c0_22, %c0_23] : memref<8x128xf32, #tpu.memory_space<vmem>>, vector<8x128xf32>
    %cst_24 = arith.constant dense<0.000000e+00> : vector<8x128xf32>
    %33 = tpu.matmul %32, %3, %cst_24 {dimension_numbers = #tpu.dot_dimension_numbers<[1], [0], [0], [1], [0, 0, 1, 1], [], []>} : vector<8x128xf32>, vector<128x128xf32>, vector<8x128xf32> -> vector<8x128xf32>
    %c1 = arith.constant 1 : index
    %c0_25 = arith.constant 0 : index
    %c0_26 = arith.constant 0 : index
    %34 = vector.load %arg2[%c1, %c0_25, %c0_26] : memref<4x8x128xf32, #tpu.memory_space<vmem>>, vector<1x8x128xf32>
    %35 = vector.shape_cast %34 : vector<1x8x128xf32> to vector<8x128xf32>
    %36 = arith.addf %33, %35 : vector<8x128xf32>
    %37 = math.tanh %36 : vector<8x128xf32>
    %c0_27 = arith.constant 0 : index
    %c0_28 = arith.constant 0 : index
    %38 = vector.load %arg9[%c0_27, %c0_28] : memref<8x128xf32, #tpu.memory_space<vmem>>, vector<8x128xf32>
    tpu.vector_store %arg9[%c0_27, %c0_28], %37 {strides = array<i32>} : memref<8x128xf32, #tpu.memory_space<vmem>>, vector<8x128xf32>,
    %c1_29 = arith.constant 1 : index
    %c0_30 = arith.constant 0 : index
    %c0_31 = arith.constant 0 : index
    %39 = vector.load %arg8[%c1_29, %c0_30, %c0_31] : memref<4x8x128xf32, #tpu.memory_space<vmem>>, vector<1x8x128xf32>
    %40 = vector.shape_cast %39 : vector<1x8x128xf32> to vector<8x128xf32>
    %41 = vector.shape_cast %37 : vector<8x128xf32> to vector<1x8x128xf32>
    tpu.vector_store %arg8[%c1_29, %c0_30, %c0_31], %41 {strides = array<i32>} : memref<4x8x128xf32, #tpu.memory_space<vmem>>, vector<1x8x128xf32>,
    %cst_32 = arith.constant dense<0.000000e+00> : vector<8x128xf32>
    %42 = tpu.matmul %37, %4, %cst_32 {dimension_numbers = #tpu.dot_dimension_numbers<[1], [0], [0], [1], [0, 0, 1, 1], [], []>} : vector<8x128xf32>, vector<128x128xf32>, vector<8x128xf32> -> vector<8x128xf32>
    %43 = vector.broadcast %5 : vector<1x128xf32> to vector<8x128xf32>
    %44 = arith.addf %42, %43 : vector<8x128xf32>
    %cst_33 = arith.constant dense<0xFF800000> : vector<8xf32>
    %45 = vector.multi_reduction <maximumf>, %44, %cst_33 [1] : vector<8x128xf32> to vector<8xf32>
    %46 = vector.shape_cast %45 : vector<8xf32> to vector<8x1xf32>
    %47 = vector.broadcast %46 : vector<8x1xf32> to vector<8x128xf32>
    %48 = arith.subf %44, %47 : vector<8x128xf32>
    %49 = math.exp %48 : vector<8x128xf32>
    %cst_34 = arith.constant dense<0.000000e+00> : vector<8xf32>
    %50 = vector.multi_reduction <add>, %49, %cst_34 [1] : vector<8x128xf32> to vector<8xf32>
    %51 = vector.shape_cast %50 : vector<8xf32> to vector<8x1xf32>
    %52 = math.log %51 : vector<8x1xf32>
    %53 = vector.broadcast %52 : vector<8x1xf32> to vector<8x128xf32>
    %54 = arith.subf %48, %53 : vector<8x128xf32>
    %c1_35 = arith.constant 1 : index
    %c0_36 = arith.constant 0 : index
    %c0_37 = arith.constant 0 : index
    %55 = vector.load %arg7[%c1_35, %c0_36, %c0_37] : memref<4x8x128xf32, #tpu.memory_space<vmem>>, vector<1x8x128xf32>
    %56 = vector.shape_cast %55 : vector<1x8x128xf32> to vector<8x128xf32>
    %57 = vector.shape_cast %54 : vector<8x128xf32> to vector<1x8x128xf32>
    tpu.vector_store %arg7[%c1_35, %c0_36, %c0_37], %57 {strides = array<i32>} : memref<4x8x128xf32, #tpu.memory_space<vmem>>, vector<1x8x128xf32>,
    %c0_38 = arith.constant 0 : index
    %c0_39 = arith.constant 0 : index
    %58 = vector.load %arg9[%c0_38, %c0_39] : memref<8x128xf32, #tpu.memory_space<vmem>>, vector<8x128xf32>
    %cst_40 = arith.constant dense<0.000000e+00> : vector<8x128xf32>
    %59 = tpu.matmul %58, %3, %cst_40 {dimension_numbers = #tpu.dot_dimension_numbers<[1], [0], [0], [1], [0, 0, 1, 1], [], []>} : vector<8x128xf32>, vector<128x128xf32>, vector<8x128xf32> -> vector<8x128xf32>
    %c2 = arith.constant 2 : index
    %c0_41 = arith.constant 0 : index
    %c0_42 = arith.constant 0 : index
    %60 = vector.load %arg2[%c2, %c0_41, %c0_42] : memref<4x8x128xf32, #tpu.memory_space<vmem>>, vector<1x8x128xf32>
    %61 = vector.shape_cast %60 : vector<1x8x128xf32> to vector<8x128xf32>
    %62 = arith.addf %59, %61 : vector<8x128xf32>
    %63 = math.tanh %62 : vector<8x128xf32>
    %c0_43 = arith.constant 0 : index
    %c0_44 = arith.constant 0 : index
    %64 = vector.load %arg9[%c0_43, %c0_44] : memref<8x128xf32, #tpu.memory_space<vmem>>, vector<8x128xf32>
    tpu.vector_store %arg9[%c0_43, %c0_44], %63 {strides = array<i32>} : memref<8x128xf32, #tpu.memory_space<vmem>>, vector<8x128xf32>,
    %c2_45 = arith.constant 2 : index
    %c0_46 = arith.constant 0 : index
    %c0_47 = arith.constant 0 : index
    %65 = vector.load %arg8[%c2_45, %c0_46, %c0_47] : memref<4x8x128xf32, #tpu.memory_space<vmem>>, vector<1x8x128xf32>
    %66 = vector.shape_cast %65 : vector<1x8x128xf32> to vector<8x128xf32>
    %67 = vector.shape_cast %63 : vector<8x128xf32> to vector<1x8x128xf32>
    tpu.vector_store %arg8[%c2_45, %c0_46, %c0_47], %67 {strides = array<i32>} : memref<4x8x128xf32, #tpu.memory_space<vmem>>, vector<1x8x128xf32>,
    %cst_48 = arith.constant dense<0.000000e+00> : vector<8x128xf32>
    %68 = tpu.matmul %63, %4, %cst_48 {dimension_numbers = #tpu.dot_dimension_numbers<[1], [0], [0], [1], [0, 0, 1, 1], [], []>} : vector<8x128xf32>, vector<128x128xf32>, vector<8x128xf32> -> vector<8x128xf32>
    %69 = vector.broadcast %5 : vector<1x128xf32> to vector<8x128xf32>
    %70 = arith.addf %68, %69 : vector<8x128xf32>
    %cst_49 = arith.constant dense<0xFF800000> : vector<8xf32>
    %71 = vector.multi_reduction <maximumf>, %70, %cst_49 [1] : vector<8x128xf32> to vector<8xf32>
    %72 = vector.shape_cast %71 : vector<8xf32> to vector<8x1xf32>
    %73 = vector.broadcast %72 : vector<8x1xf32> to vector<8x128xf32>
    %74 = arith.subf %70, %73 : vector<8x128xf32>
    %75 = math.exp %74 : vector<8x128xf32>
    %cst_50 = arith.constant dense<0.000000e+00> : vector<8xf32>
    %76 = vector.multi_reduction <add>, %75, %cst_50 [1] : vector<8x128xf32> to vector<8xf32>
    %77 = vector.shape_cast %76 : vector<8xf32> to vector<8x1xf32>
    %78 = math.log %77 : vector<8x1xf32>
    %79 = vector.broadcast %78 : vector<8x1xf32> to vector<8x128xf32>
    %80 = arith.subf %74, %79 : vector<8x128xf32>
    %c2_51 = arith.constant 2 : index
    %c0_52 = arith.constant 0 : index
    %c0_53 = arith.constant 0 : index
    %81 = vector.load %arg7[%c2_51, %c0_52, %c0_53] : memref<4x8x128xf32, #tpu.memory_space<vmem>>, vector<1x8x128xf32>
    %82 = vector.shape_cast %81 : vector<1x8x128xf32> to vector<8x128xf32>
    %83 = vector.shape_cast %80 : vector<8x128xf32> to vector<1x8x128xf32>
    tpu.vector_store %arg7[%c2_51, %c0_52, %c0_53], %83 {strides = array<i32>} : memref<4x8x128xf32, #tpu.memory_space<vmem>>, vector<1x8x128xf32>,
    %c0_54 = arith.constant 0 : index
    %c0_55 = arith.constant 0 : index
    %84 = vector.load %arg9[%c0_54, %c0_55] : memref<8x128xf32, #tpu.memory_space<vmem>>, vector<8x128xf32>
    %cst_56 = arith.constant dense<0.000000e+00> : vector<8x128xf32>
    %85 = tpu.matmul %84, %3, %cst_56 {dimension_numbers = #tpu.dot_dimension_numbers<[1], [0], [0], [1], [0, 0, 1, 1], [], []>} : vector<8x128xf32>, vector<128x128xf32>, vector<8x128xf32> -> vector<8x128xf32>
    %c3 = arith.constant 3 : index
    %c0_57 = arith.constant 0 : index
    %c0_58 = arith.constant 0 : index
    %86 = vector.load %arg2[%c3, %c0_57, %c0_58] : memref<4x8x128xf32, #tpu.memory_space<vmem>>, vector<1x8x128xf32>
    %87 = vector.shape_cast %86 : vector<1x8x128xf32> to vector<8x128xf32>
    %88 = arith.addf %85, %87 : vector<8x128xf32>
    %89 = math.tanh %88 : vector<8x128xf32>
    %c0_59 = arith.constant 0 : index
    %c0_60 = arith.constant 0 : index
    %90 = vector.load %arg9[%c0_59, %c0_60] : memref<8x128xf32, #tpu.memory_space<vmem>>, vector<8x128xf32>
    tpu.vector_store %arg9[%c0_59, %c0_60], %89 {strides = array<i32>} : memref<8x128xf32, #tpu.memory_space<vmem>>, vector<8x128xf32>,
    %c3_61 = arith.constant 3 : index
    %c0_62 = arith.constant 0 : index
    %c0_63 = arith.constant 0 : index
    %91 = vector.load %arg8[%c3_61, %c0_62, %c0_63] : memref<4x8x128xf32, #tpu.memory_space<vmem>>, vector<1x8x128xf32>
    %92 = vector.shape_cast %91 : vector<1x8x128xf32> to vector<8x128xf32>
    %93 = vector.shape_cast %89 : vector<8x128xf32> to vector<1x8x128xf32>
    tpu.vector_store %arg8[%c3_61, %c0_62, %c0_63], %93 {strides = array<i32>} : memref<4x8x128xf32, #tpu.memory_space<vmem>>, vector<1x8x128xf32>,
    %cst_64 = arith.constant dense<0.000000e+00> : vector<8x128xf32>
    %94 = tpu.matmul %89, %4, %cst_64 {dimension_numbers = #tpu.dot_dimension_numbers<[1], [0], [0], [1], [0, 0, 1, 1], [], []>} : vector<8x128xf32>, vector<128x128xf32>, vector<8x128xf32> -> vector<8x128xf32>
    %95 = vector.broadcast %5 : vector<1x128xf32> to vector<8x128xf32>
    %96 = arith.addf %94, %95 : vector<8x128xf32>
    %cst_65 = arith.constant dense<0xFF800000> : vector<8xf32>
    %97 = vector.multi_reduction <maximumf>, %96, %cst_65 [1] : vector<8x128xf32> to vector<8xf32>
    %98 = vector.shape_cast %97 : vector<8xf32> to vector<8x1xf32>
    %99 = vector.broadcast %98 : vector<8x1xf32> to vector<8x128xf32>
    %100 = arith.subf %96, %99 : vector<8x128xf32>
    %101 = math.exp %100 : vector<8x128xf32>
    %cst_66 = arith.constant dense<0.000000e+00> : vector<8xf32>
    %102 = vector.multi_reduction <add>, %101, %cst_66 [1] : vector<8x128xf32> to vector<8xf32>
    %103 = vector.shape_cast %102 : vector<8xf32> to vector<8x1xf32>
    %104 = math.log %103 : vector<8x1xf32>
    %105 = vector.broadcast %104 : vector<8x1xf32> to vector<8x128xf32>
    %106 = arith.subf %100, %105 : vector<8x128xf32>
    %c3_67 = arith.constant 3 : index
    %c0_68 = arith.constant 0 : index
    %c0_69 = arith.constant 0 : index
    %107 = vector.load %arg7[%c3_67, %c0_68, %c0_69] : memref<4x8x128xf32, #tpu.memory_space<vmem>>, vector<1x8x128xf32>
    %108 = vector.shape_cast %107 : vector<1x8x128xf32> to vector<8x128xf32>
    %109 = vector.shape_cast %106 : vector<8x128xf32> to vector<1x8x128xf32>
    tpu.vector_store %arg7[%c3_67, %c0_68, %c0_69], %109 {strides = array<i32>} : memref<4x8x128xf32, #tpu.memory_space<vmem>>, vector<1x8x128xf32>,
    return
  }
  func.func @transform_0(%arg0: i32, %arg1: i32) -> (i32, i32, i32) {
    %c0_i32 = arith.constant 0 : i32
    %c0_i32_0 = arith.constant 0 : i32
    return %arg1, %arg0, %c0_i32 : i32, i32, i32
  }
  func.func @transform_1(%arg0: i32, %arg1: i32) -> (i32, i32) {
    %c0_i32 = arith.constant 0 : i32
    %c0_i32_0 = arith.constant 0 : i32
    return %arg0, %c0_i32 : i32, i32
  }
  func.func @transform_2(%arg0: i32, %arg1: i32) -> (i32, i32) {
    %c0_i32 = arith.constant 0 : i32
    %c0_i32_0 = arith.constant 0 : i32
    %c0_i32_1 = arith.constant 0 : i32
    return %c0_i32, %c0_i32_0 : i32, i32
  }
  func.func @transform_3(%arg0: i32, %arg1: i32) -> (i32, i32) {
    %c0_i32 = arith.constant 0 : i32
    %c0_i32_0 = arith.constant 0 : i32
    %c0_i32_1 = arith.constant 0 : i32
    return %c0_i32, %c0_i32_0 : i32, i32
  }
  func.func @transform_4(%arg0: i32, %arg1: i32) -> (i32, i32) {
    %c0_i32 = arith.constant 0 : i32
    %c0_i32_0 = arith.constant 0 : i32
    %c0_i32_1 = arith.constant 0 : i32
    return %c0_i32, %c0_i32_0 : i32, i32
  }
  func.func @transform_5(%arg0: i32, %arg1: i32) -> (i32, i32, i32) {
    %c0_i32 = arith.constant 0 : i32
    %c0_i32_0 = arith.constant 0 : i32
    return %arg1, %arg0, %c0_i32 : i32, i32, i32
  }
  func.func @transform_6(%arg0: i32, %arg1: i32) -> (i32, i32, i32) {
    %c0_i32 = arith.constant 0 : i32
    %c0_i32_0 = arith.constant 0 : i32
    return %arg1, %arg0, %c0_i32 : i32, i32, i32
  }
}

</mosaic_0001>

<llo_original>
// kernel: rnn_forward_seq.1
$region0: #{rnn_forward_seq.1}
  #allocation0 [shape = 'u32[]', space=smem, size = 0x4, offset = 0x4, fixed_abs, tag = 'smem constant byte address 0x4 - core index']
  #allocation1 [shape = 'u32[144,128]{1,0:T(1,128)}', space=vmem, size = 0x12000, scoped, tag = 'internal scratch']
  #allocation2 [shape = 'f32[8,128]{1,0:T(8,128)}', space=vmem, size = 0x1000, scoped, tag = 'scratch operand']
  %s0 = inlined_call_operand.vmem [shape: f32[8,8,128], index: 0, kind: input, shape index: {}]
  %s1 = inlined_call_operand.vmem [shape: f32[8,128], index: 1, kind: input, shape index: {}]
  %s2 = inlined_call_operand.vmem [shape: f32[128,128], index: 2, kind: input, shape index: {}]
  %s3 = inlined_call_operand.vmem [shape: f32[128,128], index: 3, kind: input, shape index: {}]
  %s4 = inlined_call_operand.vmem [shape: f32[1,128], index: 4, kind: input, shape index: {}]
  %s5 = inlined_call_operand.vmem [shape: f32[8,8,128], index: 5, kind: output, shape index: {0}]
  %s6 = inlined_call_operand.vmem [shape: f32[8,8,128], index: 6, kind: output, shape index: {1}]
  %7 = xla_tuple %s5, %s6
  %s8 = sld [smem:[#allocation0]]
  $region65: #{rnn_forward_seq.1} parent=0
    _
  %s10 = ssub.s32 1, %s8
  %s11 = scalar_select 0, %s10, %s8
  loop: start=0, step=1, limit=4
  $region2: #{rnn_forward_seq.1} parent=0 // loop_pre_header
    _
  $region3: #{rnn_forward_seq.1} parent=0 // loop_header
    %s13 = sphi 0, %s17
    %p14 = scmp.ge.s32.totalorder %s13, 4
    %s20 = sphi 0, %s32
    %s21 = sphi 0, %s28
    %s22 = sphi 0, %s20
    %s23 = sphi 0, %s21
    %s24 = sphi 0, %s22
    %s25 = sphi 0, %s23
    %s37 = sphi 0, %s39
    %s40 = sphi 0, %s37
    %s41 = sphi 0, %s40
    %s57 = sphi 0, %s41
    %s63 = sphi 0, %s65
    %s66 = sphi 0, %s63
    %s67 = sphi 0, %s66
    %s83 = sphi 0, %s67
    %s87 = sphi 0, %s87
    %s89 = sphi 0, %s87
    %s90 = sphi 0, %s89
    %s104 = sphi 0, %s90
    %s108 = sphi 0, %s108
    %s110 = sphi 0, %s108
    %s111 = sphi 0, %s110
    %s125 = sphi 0, %s111
    %s129 = sphi 0, %s129
    %s131 = sphi 0, %s129
    %s132 = sphi 0, %s131
    %s146 = sphi 0, %s132
    %s154 = sphi 0, %s156
    %s157 = sphi 0, %s154
    %s158 = sphi 0, %s157
    %s174 = sphi 0, %s158
    %s182 = sphi 0, %s184
    %s185 = sphi 0, %s182
    %s186 = sphi 0, %s185
    %s202 = sphi 0, %s186
  $region4: #{rnn_forward_seq.1} parent=0 // loop_header_branch
    %16 = sbr.rel (%p14) target = $region8
  $region5: #{rnn_forward_seq.1} parent=0 // loop_body
    %s18 = ssub.s32 %s13, 1
    %s19 = ssub.s32 %s13, 2
    %s26 = sadd.s32 1, %s21
    %p27 = scmp.ge.s32.totalorder %s26, 2
    %s28 = scalar_select %p27, 0, %s26
    %s29 = sadd.s32 1, %s20
    %s30 = scalar_select %p27, %s29, %s20
    %p31 = scmp.ge.s32.totalorder %s30, 1
    %s32 = scalar_select %p31, 0, %s30
    %s33 = ssub.s32 %s21, %s28
    %s34 = ssub.s32 %s20, %s32
    %s35 = sor.u32 %s33, %s34
    %p36 = scmp.eq.s32.totalorder %s35, 0
    %s38 = sadd.s32 %s37, 1
    %s39 = scalar_select %p36, %s37, %s38
    %p42 = pneg %p36
    %p43 = scmp.eq.s32.totalorder %s13, 1
    %p44 = por %p42, %p43
    %p45 = scmp.ne.s32.totalorder %s37, %s40
    %p46 = scmp.eq.s32.totalorder %s13, 0
    %p47 = por %p45, %p46
    %p48 = scmp.ne.s32.totalorder %s37, %s40
    %p49 = scmp.eq.s32.totalorder %s18, 1
    %p50 = por %p48, %p49
    %p51 = scmp.ne.s32.totalorder %s40, %s41
    %p52 = scmp.eq.s32.totalorder %s18, 0
    %p53 = por %p51, %p52
    %p54 = scmp.ne.s32.totalorder %s40, %s41
    %p55 = scmp.eq.s32.totalorder %s19, 1
    %p56 = por %p54, %p55
    %p58 = scmp.ne.s32.totalorder %s41, %s57
    %p59 = scmp.eq.s32.totalorder %s19, 0
    %p60 = por %p58, %p59
    %s61 = ssub.s32 %s20, %s32
    %p62 = scmp.eq.s32.totalorder %s61, 0
    %s64 = sadd.s32 %s63, 1
    %s65 = scalar_select %p62, %s63, %s64
    %p68 = pneg %p62
    %p69 = scmp.eq.s32.totalorder %s13, 1
    %p70 = por %p68, %p69
    %p71 = scmp.ne.s32.totalorder %s63, %s66
    %p72 = scmp.eq.s32.totalorder %s13, 0
    %p73 = por %p71, %p72
    %p74 = scmp.ne.s32.totalorder %s63, %s66
    %p75 = scmp.eq.s32.totalorder %s18, 1
    %p76 = por %p74, %p75
    %p77 = scmp.ne.s32.totalorder %s66, %s67
    %p78 = scmp.eq.s32.totalorder %s18, 0
    %p79 = por %p77, %p78
    %p80 = scmp.ne.s32.totalorder %s66, %s67
    %p81 = scmp.eq.s32.totalorder %s19, 1
    %p82 = por %p80, %p81
    %p84 = scmp.ne.s32.totalorder %s67, %s83
    %p85 = scmp.eq.s32.totalorder %s19, 0
    %p86 = por %p84, %p85
    %s88 = sadd.s32 %s87, 1
    %p91 = scmp.eq.s32.totalorder %s13, 1
    %p92 = scmp.ne.s32.totalorder %s87, %s89
    %p93 = scmp.eq.s32.totalorder %s13, 0
    %p94 = por %p92, %p93
    %p95 = scmp.ne.s32.totalorder %s87, %s89
    %p96 = scmp.eq.s32.totalorder %s18, 1
    %p97 = por %p95, %p96
    %p98 = scmp.ne.s32.totalorder %s89, %s90
    %p99 = scmp.eq.s32.totalorder %s18, 0
    %p100 = por %p98, %p99
    %p101 = scmp.ne.s32.totalorder %s89, %s90
    %p102 = scmp.eq.s32.totalorder %s19, 1
    %p103 = por %p101, %p102
    %p105 = scmp.ne.s32.totalorder %s90, %s104
    %p106 = scmp.eq.s32.totalorder %s19, 0
    %p107 = por %p105, %p106
    %s109 = sadd.s32 %s108, 1
    %p112 = scmp.eq.s32.totalorder %s13, 1
    %p113 = scmp.ne.s32.totalorder %s108, %s110
    %p114 = scmp.eq.s32.totalorder %s13, 0
    %p115 = por %p113, %p114
    %p116 = scmp.ne.s32.totalorder %s108, %s110
    %p117 = scmp.eq.s32.totalorder %s18, 1
    %p118 = por %p116, %p117
    %p119 = scmp.ne.s32.totalorder %s110, %s111
    %p120 = scmp.eq.s32.totalorder %s18, 0
    %p121 = por %p119, %p120
    %p122 = scmp.ne.s32.totalorder %s110, %s111
    %p123 = scmp.eq.s32.totalorder %s19, 1
    %p124 = por %p122, %p123
    %p126 = scmp.ne.s32.totalorder %s111, %s125
    %p127 = scmp.eq.s32.totalorder %s19, 0
    %p128 = por %p126, %p127
    %s130 = sadd.s32 %s129, 1
    %p133 = scmp.eq.s32.totalorder %s13, 1
    %p134 = scmp.ne.s32.totalorder %s129, %s131
    %p135 = scmp.eq.s32.totalorder %s13, 0
    %p136 = por %p134, %p135
    %p137 = scmp.ne.s32.totalorder %s129, %s131
    %p138 = scmp.eq.s32.totalorder %s18, 1
    %p139 = por %p137, %p138
    %p140 = scmp.ne.s32.totalorder %s131, %s132
    %p141 = scmp.eq.s32.totalorder %s18, 0
    %p142 = por %p140, %p141
    %p143 = scmp.ne.s32.totalorder %s131, %s132
    %p144 = scmp.eq.s32.totalorder %s19, 1
    %p145 = por %p143, %p144
    %p147 = scmp.ne.s32.totalorder %s132, %s146
    %p148 = scmp.eq.s32.totalorder %s19, 0
    %p149 = por %p147, %p148
    %s150 = ssub.s32 %s21, %s28
    %s151 = ssub.s32 %s20, %s32
    %s152 = sor.u32 %s150, %s151
    %p153 = scmp.eq.s32.totalorder %s152, 0
    %s155 = sadd.s32 %s154, 1
    %s156 = scalar_select %p153, %s154, %s155
    %p159 = pneg %p153
    %p160 = scmp.eq.s32.totalorder %s13, 1
    %p161 = por %p159, %p160
    %p162 = scmp.ne.s32.totalorder %s154, %s157
    %p163 = scmp.eq.s32.totalorder %s13, 0
    %p164 = por %p162, %p163
    %p165 = scmp.ne.s32.totalorder %s154, %s157
    %p166 = scmp.eq.s32.totalorder %s18, 1
    %p167 = por %p165, %p166
    %p168 = scmp.ne.s32.totalorder %s157, %s158
    %p169 = scmp.eq.s32.totalorder %s18, 0
    %p170 = por %p168, %p169
    %p171 = scmp.ne.s32.totalorder %s157, %s158
    %p172 = scmp.eq.s32.totalorder %s19, 1
    %p173 = por %p171, %p172
    %p175 = scmp.ne.s32.totalorder %s158, %s174
    %p176 = scmp.eq.s32.totalorder %s19, 0
    %p177 = por %p175, %p176
    %s178 = ssub.s32 %s21, %s28
    %s179 = ssub.s32 %s20, %s32
    %s180 = sor.u32 %s178, %s179
    %p181 = scmp.eq.s32.totalorder %s180, 0
    %s183 = sadd.s32 %s182, 1
    %s184 = scalar_select %p181, %s182, %s183
    %p187 = pneg %p181
    %p188 = scmp.eq.s32.totalorder %s13, 1
    %p189 = por %p187, %p188
    %p190 = scmp.ne.s32.totalorder %s182, %s185
    %p191 = scmp.eq.s32.totalorder %s13, 0
    %p192 = por %p190, %p191
    %p193 = scmp.ne.s32.totalorder %s182, %s185
    %p194 = scmp.eq.s32.totalorder %s18, 1
    %p195 = por %p193, %p194
    %p196 = scmp.ne.s32.totalorder %s185, %s186
    %p197 = scmp.eq.s32.totalorder %s18, 0
    %p198 = por %p196, %p197
    %p199 = scmp.ne.s32.totalorder %s185, %s186
    %p200 = scmp.eq.s32.totalorder %s19, 1
    %p201 = por %p199, %p200
    %p203 = scmp.ne.s32.totalorder %s186, %s202
    %p204 = scmp.eq.s32.totalorder %s19, 0
    %p205 = por %p203, %p204
    %p206 = scmp.le.s32.totalorder 1, %s13
    %p207 = scmp.lt.s32.totalorder %s13, 3
    %p208 = pnand %p206, %p207
    %p209 = pneg %p208
    // Predicated region
    $region9: #{rnn_forward_seq.1} parent=5 // pred_check
      _
    $region10: #{rnn_forward_seq.1} parent=5 // pred_check_branch
      %211 = sbr.rel (%p208) target = $region12
    $region11: #{rnn_forward_seq.1} parent=5 // pred_region
      %s212 = ssub.s32 %s13, 1
      // Predicated region
      $region13: #{rnn_forward_seq.1} parent=11 // pred_check
        %p213 = pneg %p79
      $region14: #{rnn_forward_seq.1} parent=11 // pred_check_branch
        %215 = sbr.rel (%p213) target = $region16
      $region15: #{rnn_forward_seq.1} parent=11 // pred_region
        %p216 = scmp.lt.s32.totalorder %s22, 0
        %s217 = scalar_select %p216, %s22, 0
        %s218 = smul.addr %s217, 8
        %s219 = scalar_lea.vmem %s1, %s218
      $region16: #{rnn_forward_seq.1} parent=11 // pred_fallthru
        _
      // Predicated region
      $region17: #{rnn_forward_seq.1} parent=11 // pred_check
        %p220 = pneg %p100
      $region18: #{rnn_forward_seq.1} parent=11 // pred_check_branch
        %222 = sbr.rel (%p220) target = $region20
      $region19: #{rnn_forward_seq.1} parent=11 // pred_region
        _
      $region20: #{rnn_forward_seq.1} parent=11 // pred_fallthru
        _
      // Predicated region
      $region21: #{rnn_forward_seq.1} parent=11 // pred_check
        %p223 = pneg %p121
      $region22: #{rnn_forward_seq.1} parent=11 // pred_check_branch
        %225 = sbr.rel (%p223) target = $region24
      $region23: #{rnn_forward_seq.1} parent=11 // pred_region
        _
      $region24: #{rnn_forward_seq.1} parent=11 // pred_fallthru
        _
      // Predicated region
      $region25: #{rnn_forward_seq.1} parent=11 // pred_check
        %p226 = pneg %p142
      $region26: #{rnn_forward_seq.1} parent=11 // pred_check_branch
        %228 = sbr.rel (%p226) target = $region28
      $region27: #{rnn_forward_seq.1} parent=11 // pred_region
        _
      $region28: #{rnn_forward_seq.1} parent=11 // pred_fallthru
        _
    $region12: #{rnn_forward_seq.1} parent=5 // pred_fallthru
      _
    %p229 = scmp.lt.s32.totalorder %s13, 2
    // Predicated region
    $region29: #{rnn_forward_seq.1} parent=5 // pred_check
      %p230 = pneg %p229
    $region30: #{rnn_forward_seq.1} parent=5 // pred_check_branch
      %232 = sbr.rel (%p230) target = $region32
    $region31: #{rnn_forward_seq.1} parent=5 // pred_region
      // Predicated region
      $region33: #{rnn_forward_seq.1} parent=31 // pred_check
        %p233 = pneg %p47
      $region34: #{rnn_forward_seq.1} parent=31 // pred_check_branch
        %235 = sbr.rel (%p233) target = $region36
      $region35: #{rnn_forward_seq.1} parent=31 // pred_region
        %s236 = smul.u32 4, %s21
        %p237 = scmp.lt.s32.totalorder %s236, 7
        %s238 = scalar_select %p237, %s236, 7
        %p239 = scmp.lt.s32.totalorder %s20, 0
        %s240 = scalar_select %p239, %s20, 0
        %s241 = sadd.s32 %s240, %s238
        %s242 = smul.addr %s241, 8
        %s243 = scalar_lea.vmem %s0, %s242
        %s244 = smul.u32 4, %s21
      $region36: #{rnn_forward_seq.1} parent=31 // pred_fallthru
        _
    $region32: #{rnn_forward_seq.1} parent=5 // pred_fallthru
      _
    %p245 = scmp.le.s32.totalorder 1, %s13
    %p246 = scmp.lt.s32.totalorder %s13, 3
    %p247 = pnand %p245, %p246
    %p248 = pneg %p247
    // Predicated region
    $region37: #{rnn_forward_seq.1} parent=5 // pred_check
      _
    $region38: #{rnn_forward_seq.1} parent=5 // pred_check_branch
      %250 = sbr.rel (%p247) target = $region40
    $region39: #{rnn_forward_seq.1} parent=5 // pred_region
      %s251 = ssub.s32 %s13, 1
      %s252 = smul.u32 4, %s23
      %p253 = scmp.lt.s32.totalorder %s252, 7
      %s254 = scalar_select %p253, %s252, 7
      %p255 = scmp.lt.s32.totalorder %s22, 0
      %s256 = scalar_select %p255, %s22, 0
      %s257 = sadd.s32 %s256, %s254
      %s258 = smul.addr %s257, 8
      %s259 = scalar_lea.vmem %s0, %s258
      %p260 = pneg %p53
      %p261 = pneg %p50
      %p262 = scmp.lt.s32.totalorder %s22, 0
      %s263 = scalar_select %p262, %s22, 0
      %s264 = smul.addr %s263, 8
      %s265 = scalar_lea.vmem %s1, %s264
      %p266 = pneg %p79
      %p267 = pneg %p76
      %p268 = pneg %p100
      %p269 = pneg %p97
      %p270 = pneg %p121
      %p271 = pneg %p118
      %p272 = pneg %p142
      %p273 = pneg %p139
      %p274 = pneg %p170
      %p275 = pneg %p167
      %s276 = smul.u32 4, %s23
      %p277 = scmp.lt.s32.totalorder %s276, 7
      %s278 = scalar_select %p277, %s276, 7
      %p279 = scmp.lt.s32.totalorder %s22, 0
      %s280 = scalar_select %p279, %s22, 0
      %s281 = sadd.s32 %s280, %s278
      %s282 = smul.addr %s281, 8
      %s283 = scalar_lea.vmem %s5, %s282
      %p284 = pneg %p198
      %p285 = pneg %p195
      %s286 = smul.u32 4, %s23
      %p287 = scmp.lt.s32.totalorder %s286, 7
      %s288 = scalar_select %p287, %s286, 7
      %p289 = scmp.lt.s32.totalorder %s22, 0
      %s290 = scalar_select %p289, %s22, 0
      %s291 = sadd.s32 %s290, %s288
      %s292 = smul.addr %s291, 8
      %s293 = scalar_lea.vmem %s6, %s292
      %s294 = smul.u32 4, %s23
      %p295 = scmp.lt.s32.totalorder %s294, 7
      %s296 = scalar_select %p295, %s294, 7
      %p297 = scmp.lt.s32.totalorder %s22, 0
      %s298 = scalar_select %p297, %s22, 0
      %s299 = sadd.s32 %s298, %s296
      %s300 = smul.addr %s299, 8
      %s301 = scalar_lea.vmem %s0, %s300
      %s302 = smul.u32 4, %s23
      %p303 = scmp.lt.s32.totalorder %s22, 0
      %s304 = scalar_select %p303, %s22, 0
      %s305 = smul.addr %s304, 8
      %s306 = scalar_lea.vmem %s1, %s305
      %s307 = smul.u32 4, %s23
      %p308 = scmp.lt.s32.totalorder %s307, 7
      %s309 = scalar_select %p308, %s307, 7
      %p310 = scmp.lt.s32.totalorder %s22, 0
      %s311 = scalar_select %p310, %s22, 0
      %s312 = sadd.s32 %s311, %s309
      %s313 = smul.addr %s312, 8
      %s314 = scalar_lea.vmem %s5, %s313
      %s315 = smul.u32 4, %s23
      %s316 = smul.u32 4, %s23
      %p317 = scmp.lt.s32.totalorder %s316, 7
      %s318 = scalar_select %p317, %s316, 7
      %p319 = scmp.lt.s32.totalorder %s22, 0
      %s320 = scalar_select %p319, %s22, 0
      %s321 = sadd.s32 %s320, %s318
      %s322 = smul.addr %s321, 8
      %s323 = scalar_lea.vmem %s6, %s322
      %s324 = smul.u32 4, %s23
      %p325 = scmp.eq.s32.totalorder %s23, 0
      // Predicated region
      $region41: #{rnn_forward_seq.1} parent=39 // pred_check
        %p326 = pneg %p325
      $region42: #{rnn_forward_seq.1} parent=39 // pred_check_branch
        %328 = sbr.rel (%p326) target = $region44
      $region43: #{rnn_forward_seq.1} parent=39 // pred_region
        %v329 = vld [vmem:[%s306] sm:$0xff]
        %330 = vst [vmem:[#allocation2] sm:$0xff] %v329
      $region44: #{rnn_forward_seq.1} parent=39 // pred_fallthru
        _
      %v331 = vld [vmem:[%s2] sm:$0xff]
      %v332 = vld [vmem:[%s2 + $0x8] sm:$0xff]
      %v333 = vld [vmem:[%s2 + $0x10] sm:$0xff]
      %v334 = vld [vmem:[%s2 + $0x18] sm:$0xff]
      %v335 = vld [vmem:[%s2 + $0x20] sm:$0xff]
      %v336 = vld [vmem:[%s2 + $0x28] sm:$0xff]
      %v337 = vld [vmem:[%s2 + $0x30] sm:$0xff]
      %v338 = vld [vmem:[%s2 + $0x38] sm:$0xff]
      %v339 = vld [vmem:[%s2 + $0x40] sm:$0xff]
      %v340 = vld [vmem:[%s2 + $0x48] sm:$0xff]
      %v341 = vld [vmem:[%s2 + $0x50] sm:$0xff]
      %v342 = vld [vmem:[%s2 + $0x58] sm:$0xff]
      %v343 = vld [vmem:[%s2 + $0x60] sm:$0xff]
      %v344 = vld [vmem:[%s2 + $0x68] sm:$0xff]
      %v345 = vld [vmem:[%s2 + $0x70] sm:$0xff]
      %v346 = vld [vmem:[%s2 + $0x78] sm:$0xff]
      %v347 = vld [vmem:[%s3] sm:$0xff]
      %v348 = vld [vmem:[%s3 + $0x8] sm:$0xff]
      %v349 = vld [vmem:[%s3 + $0x10] sm:$0xff]
      %v350 = vld [vmem:[%s3 + $0x18] sm:$0xff]
      %v351 = vld [vmem:[%s3 + $0x20] sm:$0xff]
      %v352 = vld [vmem:[%s3 + $0x28] sm:$0xff]
      %v353 = vld [vmem:[%s3 + $0x30] sm:$0xff]
      %v354 = vld [vmem:[%s3 + $0x38] sm:$0xff]
      %v355 = vld [vmem:[%s3 + $0x40] sm:$0xff]
      %v356 = vld [vmem:[%s3 + $0x48] sm:$0xff]
      %v357 = vld [vmem:[%s3 + $0x50] sm:$0xff]
      %v358 = vld [vmem:[%s3 + $0x58] sm:$0xff]
      %v359 = vld [vmem:[%s3 + $0x60] sm:$0xff]
      %v360 = vld [vmem:[%s3 + $0x68] sm:$0xff]
      %v361 = vld [vmem:[%s3 + $0x70] sm:$0xff]
      %v362 = vld [vmem:[%s3 + $0x78] sm:$0xff]
      %v363 = vld [vmem:[%s4] sm:$0x1]
      %v364 = vld [vmem:[#allocation2] sm:$0xff]
      %v365 = vld [vmem:[%s301] sm:$0xff]
      %366 = vmatprep.subr.mxu0 0.0
      %367 = vmatpush1.msra.mxu0 %v331
      %368 = vmatprep.subr.mxu0 0.0
      %369 = vmatpush1.msra.mxu0 %v332
      %370 = vmatprep.subr.mxu0 0.0
      %371 = vmatpush1.msra.mxu0 %v333
      %372 = vmatprep.subr.mxu0 0.0
      %373 = vmatpush1.msra.mxu0 %v334
      %374 = vmatprep.subr.mxu0 0.0
      %375 = vmatpush1.msra.mxu0 %v335
      %376 = vmatprep.subr.mxu0 0.0
      %377 = vmatpush1.msra.mxu0 %v336
      %378 = vmatprep.subr.mxu0 0.0
      %379 = vmatpush1.msra.mxu0 %v337
      %380 = vmatprep.subr.mxu0 0.0
      %381 = vmatpush1.msra.mxu0 %v338
      %382 = vmatprep.subr.mxu0 0.0
      %383 = vmatpush1.msra.mxu0 %v339
      %384 = vmatprep.subr.mxu0 0.0
      %385 = vmatpush1.msra.mxu0 %v340
      %386 = vmatprep.subr.mxu0 0.0
      %387 = vmatpush1.msra.mxu0 %v341
      %388 = vmatprep.subr.mxu0 0.0
      %389 = vmatpush1.msra.mxu0 %v342
      %390 = vmatprep.subr.mxu0 0.0
      %391 = vmatpush1.msra.mxu0 %v343
      %392 = vmatprep.subr.mxu0 0.0
      %393 = vmatpush1.msra.mxu0 %v344
      %394 = vmatprep.subr.mxu0 0.0
      %395 = vmatpush1.msra.mxu0 %v345
      %396 = vmatprep.subr.mxu0 0.0
      %397 = vmatpush1.msra.mxu0 %v346
      %398 = vmatprep.subr.mxu0 0.0
      %399 = vmatpush1.msra.mxu0 0.0
      %400 = vmatprep.subr.mxu0 0.0
      %401 = vmatpush1.msra.mxu0 0.0
      %402 = vmatprep.subr.mxu0 0.0
      %403 = vmatpush1.msra.mxu0 0.0
      %404 = vmatprep.subr.mxu0 0.0
      %405 = vmatpush1.msra.mxu0 0.0
      %406 = vmatprep.subr.mxu0 0.0
      %407 = vmatpush1.msra.mxu0 0.0
      %408 = vmatprep.subr.mxu0 0.0
      %409 = vmatpush1.msra.mxu0 0.0
      %410 = vmatprep.subr.mxu0 0.0
      %411 = vmatpush1.msra.mxu0 0.0
      %412 = vmatprep.subr.mxu0 0.0
      %413 = vmatpush1.msra.mxu0 0.0
      %414 = vmatprep.subr.mxu0 0.0
      %415 = vmatpush1.msra.mxu0 0.0
      %416 = vmatprep.subr.mxu0 0.0
      %417 = vmatpush1.msra.mxu0 0.0
      %418 = vmatprep.subr.mxu0 0.0
      %419 = vmatpush1.msra.mxu0 0.0
      %420 = vmatprep.subr.mxu0 0.0
      %421 = vmatpush1.msra.mxu0 0.0
      %422 = vmatprep.subr.mxu0 0.0
      %423 = vmatpush1.msra.mxu0 0.0
      %424 = vmatprep.subr.mxu0 0.0
      %425 = vmatpush1.msra.mxu0 0.0
      %426 = vmatprep.subr.mxu0 0.0
      %427 = vmatpush1.msra.mxu0 0.0
      %428 = vmatprep.subr.mxu0 0.0
      %429 = vmatpush1.msra.mxu0 0.0
      %430 = vmatprep.mubr.f32.mxu0 0.0
      %431 = vmatmul.mubr.f32.gmra.mrb[0].mxu0 %v364
      %v432 = vpop.f32.mrb[0].mxu0
      %v433 = vadd.f32 %v365, %v432
      %v434 = vpop.f32.mrb[0].mxu0
      %435 = vdwg.mxu0
      %v436 = vtanh.pop %v433
      %437 = vst [vmem:[#allocation2] sm:$0xff] %v436
      %438 = vst [vmem:[%s323] sm:$0xff] %v436
      %v440 = vlaneseq
      %v441 = vshrl.u32 %v440, 7
      %v442 = vsub.s32 0, %v441
      %v443 = vrot.slane %v363, %v442
      %445 = vmatprep.subr.mxu0 0.0
      %446 = vmatpush1.msra.mxu0 %v347
      %447 = vmatprep.subr.mxu0 0.0
      %448 = vmatpush1.msra.mxu0 %v348
      %449 = vmatprep.subr.mxu0 0.0
      %450 = vmatpush1.msra.mxu0 %v349
      %451 = vmatprep.subr.mxu0 0.0
      %452 = vmatpush1.msra.mxu0 %v350
      %453 = vmatprep.subr.mxu0 0.0
      %454 = vmatpush1.msra.mxu0 %v351
      %455 = vmatprep.subr.mxu0 0.0
      %456 = vmatpush1.msra.mxu0 %v352
      %457 = vmatprep.subr.mxu0 0.0
      %458 = vmatpush1.msra.mxu0 %v353
      %459 = vmatprep.subr.mxu0 0.0
      %460 = vmatpush1.msra.mxu0 %v354
      %461 = vmatprep.subr.mxu0 0.0
      %462 = vmatpush1.msra.mxu0 %v355
      %463 = vmatprep.subr.mxu0 0.0
      %464 = vmatpush1.msra.mxu0 %v356
      %465 = vmatprep.subr.mxu0 0.0
      %466 = vmatpush1.msra.mxu0 %v357
      %467 = vmatprep.subr.mxu0 0.0
      %468 = vmatpush1.msra.mxu0 %v358
      %469 = vmatprep.subr.mxu0 0.0
      %470 = vmatpush1.msra.mxu0 %v359
      %471 = vmatprep.subr.mxu0 0.0
      %472 = vmatpush1.msra.mxu0 %v360
      %473 = vmatprep.subr.mxu0 0.0
      %474 = vmatpush1.msra.mxu0 %v361
      %475 = vmatprep.subr.mxu0 0.0
      %476 = vmatpush1.msra.mxu0 %v362
      %477 = vmatprep.subr.mxu0 0.0
      %478 = vmatpush1.msra.mxu0 0.0
      %479 = vmatprep.subr.mxu0 0.0
      %480 = vmatpush1.msra.mxu0 0.0
      %481 = vmatprep.subr.mxu0 0.0
      %482 = vmatpush1.msra.mxu0 0.0
      %483 = vmatprep.subr.mxu0 0.0
      %484 = vmatpush1.msra.mxu0 0.0
      %485 = vmatprep.subr.mxu0 0.0
      %486 = vmatpush1.msra.mxu0 0.0
      %487 = vmatprep.subr.mxu0 0.0
      %488 = vmatpush1.msra.mxu0 0.0
      %489 = vmatprep.subr.mxu0 0.0
      %490 = vmatpush1.msra.mxu0 0.0
      %491 = vmatprep.subr.mxu0 0.0
      %492 = vmatpush1.msra.mxu0 0.0
      %493 = vmatprep.subr.mxu0 0.0
      %494 = vmatpush1.msra.mxu0 0.0
      %495 = vmatprep.subr.mxu0 0.0
      %496 = vmatpush1.msra.mxu0 0.0
      %497 = vmatprep.subr.mxu0 0.0
      %498 = vmatpush1.msra.mxu0 0.0
      %499 = vmatprep.subr.mxu0 0.0
      %500 = vmatpush1.msra.mxu0 0.0
      %501 = vmatprep.subr.mxu0 0.0
      %502 = vmatpush1.msra.mxu0 0.0
      %503 = vmatprep.subr.mxu0 0.0
      %504 = vmatpush1.msra.mxu0 0.0
      %505 = vmatprep.subr.mxu0 0.0
      %506 = vmatpush1.msra.mxu0 0.0
      %507 = vmatprep.subr.mxu0 0.0
      %508 = vmatpush1.msra.mxu0 0.0
      %509 = vmatprep.mubr.f32.mxu0 0.0
      %510 = vmatmul.mubr.f32.gmra.mrb[0].mxu0 %v436
      %v511 = vpop.f32.mrb[0].mxu0
      %v512 = vadd.f32 %v443, %v511
      %v513 = vpop.f32.mrb[0].mxu0
      %514 = vdwg.mxu0
      %515 = vmax.xlane.f32.xlu0 %v512
      %v516 = vpop.xlane.xlu0 %515
      %v517 = vsub.f32 %v512, %v516
      %v518 = vmul.f32 %v517, 1.442695
      %v519 = vpow.pop %v518
      %520 = vadd.xlane.f32.xlu0 %v519
      %v521 = vpop.xlane.xlu0 %520
      %v522 = vlog2.pop %v521
      %v523 = vmul.f32 %v522, 0.6931472
      %v524 = vsub.f32 %v517, %v523
      %525 = vst [vmem:[%s314] sm:$0xff] %v524
      %v526 = vld [vmem:[#allocation2] sm:$0xff]
      %s527 = scalar_lea.vmem %s301, 8
      %v528 = vld [vmem:[%s527] sm:$0xff]
      %529 = vmatprep.subr.mxu0 0.0
      %530 = vmatpush1.msra.mxu0 %v331
      %531 = vmatprep.subr.mxu0 0.0
      %532 = vmatpush1.msra.mxu0 %v332
      %533 = vmatprep.subr.mxu0 0.0
      %534 = vmatpush1.msra.mxu0 %v333
      %535 = vmatprep.subr.mxu0 0.0
      %536 = vmatpush1.msra.mxu0 %v334
      %537 = vmatprep.subr.mxu0 0.0
      %538 = vmatpush1.msra.mxu0 %v335
      %539 = vmatprep.subr.mxu0 0.0
      %540 = vmatpush1.msra.mxu0 %v336
      %541 = vmatprep.subr.mxu0 0.0
      %542 = vmatpush1.msra.mxu0 %v337
      %543 = vmatprep.subr.mxu0 0.0
      %544 = vmatpush1.msra.mxu0 %v338
      %545 = vmatprep.subr.mxu0 0.0
      %546 = vmatpush1.msra.mxu0 %v339
      %547 = vmatprep.subr.mxu0 0.0
      %548 = vmatpush1.msra.mxu0 %v340
      %549 = vmatprep.subr.mxu0 0.0
      %550 = vmatpush1.msra.mxu0 %v341
      %551 = vmatprep.subr.mxu0 0.0
      %552 = vmatpush1.msra.mxu0 %v342
      %553 = vmatprep.subr.mxu0 0.0
      %554 = vmatpush1.msra.mxu0 %v343
      %555 = vmatprep.subr.mxu0 0.0
      %556 = vmatpush1.msra.mxu0 %v344
      %557 = vmatprep.subr.mxu0 0.0
      %558 = vmatpush1.msra.mxu0 %v345
      %559 = vmatprep.subr.mxu0 0.0
      %560 = vmatpush1.msra.mxu0 %v346
      %561 = vmatprep.subr.mxu0 0.0
      %562 = vmatpush1.msra.mxu0 0.0
      %563 = vmatprep.subr.mxu0 0.0
      %564 = vmatpush1.msra.mxu0 0.0
      %565 = vmatprep.subr.mxu0 0.0
      %566 = vmatpush1.msra.mxu0 0.0
      %567 = vmatprep.subr.mxu0 0.0
      %568 = vmatpush1.msra.mxu0 0.0
      %569 = vmatprep.subr.mxu0 0.0
      %570 = vmatpush1.msra.mxu0 0.0
      %571 = vmatprep.subr.mxu0 0.0
      %572 = vmatpush1.msra.mxu0 0.0
      %573 = vmatprep.subr.mxu0 0.0
      %574 = vmatpush1.msra.mxu0 0.0
      %575 = vmatprep.subr.mxu0 0.0
      %576 = vmatpush1.msra.mxu0 0.0
      %577 = vmatprep.subr.mxu0 0.0
      %578 = vmatpush1.msra.mxu0 0.0
      %579 = vmatprep.subr.mxu0 0.0
      %580 = vmatpush1.msra.mxu0 0.0
      %581 = vmatprep.subr.mxu0 0.0
      %582 = vmatpush1.msra.mxu0 0.0
      %583 = vmatprep.subr.mxu0 0.0
      %584 = vmatpush1.msra.mxu0 0.0
      %585 = vmatprep.subr.mxu0 0.0
      %586 = vmatpush1.msra.mxu0 0.0
      %587 = vmatprep.subr.mxu0 0.0
      %588 = vmatpush1.msra.mxu0 0.0
      %589 = vmatprep.subr.mxu0 0.0
      %590 = vmatpush1.msra.mxu0 0.0
      %591 = vmatprep.subr.mxu0 0.0
      %592 = vmatpush1.msra.mxu0 0.0
      %593 = vmatprep.mubr.f32.mxu0 0.0
      %594 = vmatmul.mubr.f32.gmra.mrb[0].mxu0 %v526
      %v595 = vpop.f32.mrb[0].mxu0
      %v596 = vadd.f32 %v528, %v595
      %v597 = vpop.f32.mrb[0].mxu0
      %598 = vdwg.mxu0
      %v599 = vtanh.pop %v596
      %600 = vst [vmem:[#allocation2] sm:$0xff] %v599
      %s601 = scalar_lea.vmem %s323, 8
      %602 = vst [vmem:[%s601] sm:$0xff] %v599
      %603 = vmatprep.subr.mxu0 0.0
      %604 = vmatpush1.msra.mxu0 %v347
      %605 = vmatprep.subr.mxu0 0.0
      %606 = vmatpush1.msra.mxu0 %v348
      %607 = vmatprep.subr.mxu0 0.0
      %608 = vmatpush1.msra.mxu0 %v349
      %609 = vmatprep.subr.mxu0 0.0
      %610 = vmatpush1.msra.mxu0 %v350
      %611 = vmatprep.subr.mxu0 0.0
      %612 = vmatpush1.msra.mxu0 %v351
      %613 = vmatprep.subr.mxu0 0.0
      %614 = vmatpush1.msra.mxu0 %v352
      %615 = vmatprep.subr.mxu0 0.0
      %616 = vmatpush1.msra.mxu0 %v353
      %617 = vmatprep.subr.mxu0 0.0
      %618 = vmatpush1.msra.mxu0 %v354
      %619 = vmatprep.subr.mxu0 0.0
      %620 = vmatpush1.msra.mxu0 %v355
      %621 = vmatprep.subr.mxu0 0.0
      %622 = vmatpush1.msra.mxu0 %v356
      %623 = vmatprep.subr.mxu0 0.0
      %624 = vmatpush1.msra.mxu0 %v357
      %625 = vmatprep.subr.mxu0 0.0
      %626 = vmatpush1.msra.mxu0 %v358
      %627 = vmatprep.subr.mxu0 0.0
      %628 = vmatpush1.msra.mxu0 %v359
      %629 = vmatprep.subr.mxu0 0.0
      %630 = vmatpush1.msra.mxu0 %v360
      %631 = vmatprep.subr.mxu0 0.0
      %632 = vmatpush1.msra.mxu0 %v361
      %633 = vmatprep.subr.mxu0 0.0
      %634 = vmatpush1.msra.mxu0 %v362
      %635 = vmatprep.subr.mxu0 0.0
      %636 = vmatpush1.msra.mxu0 0.0
      %637 = vmatprep.subr.mxu0 0.0
      %638 = vmatpush1.msra.mxu0 0.0
      %639 = vmatprep.subr.mxu0 0.0
      %640 = vmatpush1.msra.mxu0 0.0
      %641 = vmatprep.subr.mxu0 0.0
      %642 = vmatpush1.msra.mxu0 0.0
      %643 = vmatprep.subr.mxu0 0.0
      %644 = vmatpush1.msra.mxu0 0.0
      %645 = vmatprep.subr.mxu0 0.0
      %646 = vmatpush1.msra.mxu0 0.0
      %647 = vmatprep.subr.mxu0 0.0
      %648 = vmatpush1.msra.mxu0 0.0
      %649 = vmatprep.subr.mxu0 0.0
      %650 = vmatpush1.msra.mxu0 0.0
      %651 = vmatprep.subr.mxu0 0.0
      %652 = vmatpush1.msra.mxu0 0.0
      %653 = vmatprep.subr.mxu0 0.0
      %654 = vmatpush1.msra.mxu0 0.0
      %655 = vmatprep.subr.mxu0 0.0
      %656 = vmatpush1.msra.mxu0 0.0
      %657 = vmatprep.subr.mxu0 0.0
      %658 = vmatpush1.msra.mxu0 0.0
      %659 = vmatprep.subr.mxu0 0.0
      %660 = vmatpush1.msra.mxu0 0.0
      %661 = vmatprep.subr.mxu0 0.0
      %662 = vmatpush1.msra.mxu0 0.0
      %663 = vmatprep.subr.mxu0 0.0
      %664 = vmatpush1.msra.mxu0 0.0
      %665 = vmatprep.subr.mxu0 0.0
      %666 = vmatpush1.msra.mxu0 0.0
      %667 = vmatprep.mubr.f32.mxu0 0.0
      %668 = vmatmul.mubr.f32.gmra.mrb[0].mxu0 %v599
      %v669 = vpop.f32.mrb[0].mxu0
      %v670 = vadd.f32 %v443, %v669
      %v671 = vpop.f32.mrb[0].mxu0
      %672 = vdwg.mxu0
      %673 = vmax.xlane.f32.xlu0 %v670
      %v674 = vpop.xlane.xlu0 %673
      %v675 = vsub.f32 %v670, %v674
      %v676 = vmul.f32 %v675, 1.442695
      %v677 = vpow.pop %v676
      %678 = vadd.xlane.f32.xlu0 %v677
      %v679 = vpop.xlane.xlu0 %678
      %v680 = vlog2.pop %v679
      %v681 = vmul.f32 %v680, 0.6931472
      %v682 = vsub.f32 %v675, %v681
      %s683 = scalar_lea.vmem %s314, 8
      %684 = vst [vmem:[%s683] sm:$0xff] %v682
      %v685 = vld [vmem:[#allocation2] sm:$0xff]
      %s686 = scalar_lea.vmem %s301, 16
      %v687 = vld [vmem:[%s686] sm:$0xff]
      %688 = vmatprep.subr.mxu0 0.0
      %689 = vmatpush1.msra.mxu0 %v331
      %690 = vmatprep.subr.mxu0 0.0
      %691 = vmatpush1.msra.mxu0 %v332
      %692 = vmatprep.subr.mxu0 0.0
      %693 = vmatpush1.msra.mxu0 %v333
      %694 = vmatprep.subr.mxu0 0.0
      %695 = vmatpush1.msra.mxu0 %v334
      %696 = vmatprep.subr.mxu0 0.0
      %697 = vmatpush1.msra.mxu0 %v335
      %698 = vmatprep.subr.mxu0 0.0
      %699 = vmatpush1.msra.mxu0 %v336
      %700 = vmatprep.subr.mxu0 0.0
      %701 = vmatpush1.msra.mxu0 %v337
      %702 = vmatprep.subr.mxu0 0.0
      %703 = vmatpush1.msra.mxu0 %v338
      %704 = vmatprep.subr.mxu0 0.0
      %705 = vmatpush1.msra.mxu0 %v339
      %706 = vmatprep.subr.mxu0 0.0
      %707 = vmatpush1.msra.mxu0 %v340
      %708 = vmatprep.subr.mxu0 0.0
      %709 = vmatpush1.msra.mxu0 %v341
      %710 = vmatprep.subr.mxu0 0.0
      %711 = vmatpush1.msra.mxu0 %v342
      %712 = vmatprep.subr.mxu0 0.0
      %713 = vmatpush1.msra.mxu0 %v343
      %714 = vmatprep.subr.mxu0 0.0
      %715 = vmatpush1.msra.mxu0 %v344
      %716 = vmatprep.subr.mxu0 0.0
      %717 = vmatpush1.msra.mxu0 %v345
      %718 = vmatprep.subr.mxu0 0.0
      %719 = vmatpush1.msra.mxu0 %v346
      %720 = vmatprep.subr.mxu0 0.0
      %721 = vmatpush1.msra.mxu0 0.0
      %722 = vmatprep.subr.mxu0 0.0
      %723 = vmatpush1.msra.mxu0 0.0
      %724 = vmatprep.subr.mxu0 0.0
      %725 = vmatpush1.msra.mxu0 0.0
      %726 = vmatprep.subr.mxu0 0.0
      %727 = vmatpush1.msra.mxu0 0.0
      %728 = vmatprep.subr.mxu0 0.0
      %729 = vmatpush1.msra.mxu0 0.0
      %730 = vmatprep.subr.mxu0 0.0
      %731 = vmatpush1.msra.mxu0 0.0
      %732 = vmatprep.subr.mxu0 0.0
      %733 = vmatpush1.msra.mxu0 0.0
      %734 = vmatprep.subr.mxu0 0.0
      %735 = vmatpush1.msra.mxu0 0.0
      %736 = vmatprep.subr.mxu0 0.0
      %737 = vmatpush1.msra.mxu0 0.0
      %738 = vmatprep.subr.mxu0 0.0
      %739 = vmatpush1.msra.mxu0 0.0
      %740 = vmatprep.subr.mxu0 0.0
      %741 = vmatpush1.msra.mxu0 0.0
      %742 = vmatprep.subr.mxu0 0.0
      %743 = vmatpush1.msra.mxu0 0.0
      %744 = vmatprep.subr.mxu0 0.0
      %745 = vmatpush1.msra.mxu0 0.0
      %746 = vmatprep.subr.mxu0 0.0
      %747 = vmatpush1.msra.mxu0 0.0
      %748 = vmatprep.subr.mxu0 0.0
      %749 = vmatpush1.msra.mxu0 0.0
      %750 = vmatprep.subr.mxu0 0.0
      %751 = vmatpush1.msra.mxu0 0.0
      %752 = vmatprep.mubr.f32.mxu0 0.0
      %753 = vmatmul.mubr.f32.gmra.mrb[0].mxu0 %v685
      %v754 = vpop.f32.mrb[0].mxu0
      %v755 = vadd.f32 %v687, %v754
      %v756 = vpop.f32.mrb[0].mxu0
      %757 = vdwg.mxu0
      %v758 = vtanh.pop %v755
      %759 = vst [vmem:[#allocation2] sm:$0xff] %v758
      %s760 = scalar_lea.vmem %s323, 16
      %761 = vst [vmem:[%s760] sm:$0xff] %v758
      %762 = vmatprep.subr.mxu0 0.0
      %763 = vmatpush1.msra.mxu0 %v347
      %764 = vmatprep.subr.mxu0 0.0
      %765 = vmatpush1.msra.mxu0 %v348
      %766 = vmatprep.subr.mxu0 0.0
      %767 = vmatpush1.msra.mxu0 %v349
      %768 = vmatprep.subr.mxu0 0.0
      %769 = vmatpush1.msra.mxu0 %v350
      %770 = vmatprep.subr.mxu0 0.0
      %771 = vmatpush1.msra.mxu0 %v351
      %772 = vmatprep.subr.mxu0 0.0
      %773 = vmatpush1.msra.mxu0 %v352
      %774 = vmatprep.subr.mxu0 0.0
      %775 = vmatpush1.msra.mxu0 %v353
      %776 = vmatprep.subr.mxu0 0.0
      %777 = vmatpush1.msra.mxu0 %v354
      %778 = vmatprep.subr.mxu0 0.0
      %779 = vmatpush1.msra.mxu0 %v355
      %780 = vmatprep.subr.mxu0 0.0
      %781 = vmatpush1.msra.mxu0 %v356
      %782 = vmatprep.subr.mxu0 0.0
      %783 = vmatpush1.msra.mxu0 %v357
      %784 = vmatprep.subr.mxu0 0.0
      %785 = vmatpush1.msra.mxu0 %v358
      %786 = vmatprep.subr.mxu0 0.0
      %787 = vmatpush1.msra.mxu0 %v359
      %788 = vmatprep.subr.mxu0 0.0
      %789 = vmatpush1.msra.mxu0 %v360
      %790 = vmatprep.subr.mxu0 0.0
      %791 = vmatpush1.msra.mxu0 %v361
      %792 = vmatprep.subr.mxu0 0.0
      %793 = vmatpush1.msra.mxu0 %v362
      %794 = vmatprep.subr.mxu0 0.0
      %795 = vmatpush1.msra.mxu0 0.0
      %796 = vmatprep.subr.mxu0 0.0
      %797 = vmatpush1.msra.mxu0 0.0
      %798 = vmatprep.subr.mxu0 0.0
      %799 = vmatpush1.msra.mxu0 0.0
      %800 = vmatprep.subr.mxu0 0.0
      %801 = vmatpush1.msra.mxu0 0.0
      %802 = vmatprep.subr.mxu0 0.0
      %803 = vmatpush1.msra.mxu0 0.0
      %804 = vmatprep.subr.mxu0 0.0
      %805 = vmatpush1.msra.mxu0 0.0
      %806 = vmatprep.subr.mxu0 0.0
      %807 = vmatpush1.msra.mxu0 0.0
      %808 = vmatprep.subr.mxu0 0.0
      %809 = vmatpush1.msra.mxu0 0.0
      %810 = vmatprep.subr.mxu0 0.0
      %811 = vmatpush1.msra.mxu0 0.0
      %812 = vmatprep.subr.mxu0 0.0
      %813 = vmatpush1.msra.mxu0 0.0
      %814 = vmatprep.subr.mxu0 0.0
      %815 = vmatpush1.msra.mxu0 0.0
      %816 = vmatprep.subr.mxu0 0.0
      %817 = vmatpush1.msra.mxu0 0.0
      %818 = vmatprep.subr.mxu0 0.0
      %819 = vmatpush1.msra.mxu0 0.0
      %820 = vmatprep.subr.mxu0 0.0
      %821 = vmatpush1.msra.mxu0 0.0
      %822 = vmatprep.subr.mxu0 0.0
      %823 = vmatpush1.msra.mxu0 0.0
      %824 = vmatprep.subr.mxu0 0.0
      %825 = vmatpush1.msra.mxu0 0.0
      %826 = vmatprep.mubr.f32.mxu0 0.0
      %827 = vmatmul.mubr.f32.gmra.mrb[0].mxu0 %v758
      %v828 = vpop.f32.mrb[0].mxu0
      %v829 = vadd.f32 %v443, %v828
      %v830 = vpop.f32.mrb[0].mxu0
      %831 = vdwg.mxu0
      %832 = vmax.xlane.f32.xlu0 %v829
      %v833 = vpop.xlane.xlu0 %832
      %v834 = vsub.f32 %v829, %v833
      %v835 = vmul.f32 %v834, 1.442695
      %v836 = vpow.pop %v835
      %837 = vadd.xlane.f32.xlu0 %v836
      %v838 = vpop.xlane.xlu0 %837
      %v839 = vlog2.pop %v838
      %v840 = vmul.f32 %v839, 0.6931472
      %v841 = vsub.f32 %v834, %v840
      %s842 = scalar_lea.vmem %s314, 16
      %843 = vst [vmem:[%s842] sm:$0xff] %v841
      %v844 = vld [vmem:[#allocation2] sm:$0xff]
      %s845 = scalar_lea.vmem %s301, 24
      %v846 = vld [vmem:[%s845] sm:$0xff]
      %847 = vmatprep.subr.mxu0 0.0
      %848 = vmatpush1.msra.mxu0 %v331
      %849 = vmatprep.subr.mxu0 0.0
      %850 = vmatpush1.msra.mxu0 %v332
      %851 = vmatprep.subr.mxu0 0.0
      %852 = vmatpush1.msra.mxu0 %v333
      %853 = vmatprep.subr.mxu0 0.0
      %854 = vmatpush1.msra.mxu0 %v334
      %855 = vmatprep.subr.mxu0 0.0
      %856 = vmatpush1.msra.mxu0 %v335
      %857 = vmatprep.subr.mxu0 0.0
      %858 = vmatpush1.msra.mxu0 %v336
      %859 = vmatprep.subr.mxu0 0.0
      %860 = vmatpush1.msra.mxu0 %v337
      %861 = vmatprep.subr.mxu0 0.0
      %862 = vmatpush1.msra.mxu0 %v338
      %863 = vmatprep.subr.mxu0 0.0
      %864 = vmatpush1.msra.mxu0 %v339
      %865 = vmatprep.subr.mxu0 0.0
      %866 = vmatpush1.msra.mxu0 %v340
      %867 = vmatprep.subr.mxu0 0.0
      %868 = vmatpush1.msra.mxu0 %v341
      %869 = vmatprep.subr.mxu0 0.0
      %870 = vmatpush1.msra.mxu0 %v342
      %871 = vmatprep.subr.mxu0 0.0
      %872 = vmatpush1.msra.mxu0 %v343
      %873 = vmatprep.subr.mxu0 0.0
      %874 = vmatpush1.msra.mxu0 %v344
      %875 = vmatprep.subr.mxu0 0.0
      %876 = vmatpush1.msra.mxu0 %v345
      %877 = vmatprep.subr.mxu0 0.0
      %878 = vmatpush1.msra.mxu0 %v346
      %879 = vmatprep.subr.mxu0 0.0
      %880 = vmatpush1.msra.mxu0 0.0
      %881 = vmatprep.subr.mxu0 0.0
      %882 = vmatpush1.msra.mxu0 0.0
      %883 = vmatprep.subr.mxu0 0.0
      %884 = vmatpush1.msra.mxu0 0.0
      %885 = vmatprep.subr.mxu0 0.0
      %886 = vmatpush1.msra.mxu0 0.0
      %887 = vmatprep.subr.mxu0 0.0
      %888 = vmatpush1.msra.mxu0 0.0
      %889 = vmatprep.subr.mxu0 0.0
      %890 = vmatpush1.msra.mxu0 0.0
      %891 = vmatprep.subr.mxu0 0.0
      %892 = vmatpush1.msra.mxu0 0.0
      %893 = vmatprep.subr.mxu0 0.0
      %894 = vmatpush1.msra.mxu0 0.0
      %895 = vmatprep.subr.mxu0 0.0
      %896 = vmatpush1.msra.mxu0 0.0
      %897 = vmatprep.subr.mxu0 0.0
      %898 = vmatpush1.msra.mxu0 0.0
      %899 = vmatprep.subr.mxu0 0.0
      %900 = vmatpush1.msra.mxu0 0.0
      %901 = vmatprep.subr.mxu0 0.0
      %902 = vmatpush1.msra.mxu0 0.0
      %903 = vmatprep.subr.mxu0 0.0
      %904 = vmatpush1.msra.mxu0 0.0
      %905 = vmatprep.subr.mxu0 0.0
      %906 = vmatpush1.msra.mxu0 0.0
      %907 = vmatprep.subr.mxu0 0.0
      %908 = vmatpush1.msra.mxu0 0.0
      %909 = vmatprep.subr.mxu0 0.0
      %910 = vmatpush1.msra.mxu0 0.0
      %911 = vmatprep.mubr.f32.mxu0 0.0
      %912 = vmatmul.mubr.f32.gmra.mrb[0].mxu0 %v844
      %v913 = vpop.f32.mrb[0].mxu0
      %v914 = vadd.f32 %v846, %v913
      %v915 = vpop.f32.mrb[0].mxu0
      %916 = vdwg.mxu0
      %v917 = vtanh.pop %v914
      %918 = vst [vmem:[#allocation2] sm:$0xff] %v917
      %s919 = scalar_lea.vmem %s323, 24
      %920 = vst [vmem:[%s919] sm:$0xff] %v917
      %921 = vmatprep.subr.mxu0 0.0
      %922 = vmatpush1.msra.mxu0 %v347
      %923 = vmatprep.subr.mxu0 0.0
      %924 = vmatpush1.msra.mxu0 %v348
      %925 = vmatprep.subr.mxu0 0.0
      %926 = vmatpush1.msra.mxu0 %v349
      %927 = vmatprep.subr.mxu0 0.0
      %928 = vmatpush1.msra.mxu0 %v350
      %929 = vmatprep.subr.mxu0 0.0
      %930 = vmatpush1.msra.mxu0 %v351
      %931 = vmatprep.subr.mxu0 0.0
      %932 = vmatpush1.msra.mxu0 %v352
      %933 = vmatprep.subr.mxu0 0.0
      %934 = vmatpush1.msra.mxu0 %v353
      %935 = vmatprep.subr.mxu0 0.0
      %936 = vmatpush1.msra.mxu0 %v354
      %937 = vmatprep.subr.mxu0 0.0
      %938 = vmatpush1.msra.mxu0 %v355
      %939 = vmatprep.subr.mxu0 0.0
      %940 = vmatpush1.msra.mxu0 %v356
      %941 = vmatprep.subr.mxu0 0.0
      %942 = vmatpush1.msra.mxu0 %v357
      %943 = vmatprep.subr.mxu0 0.0
      %944 = vmatpush1.msra.mxu0 %v358
      %945 = vmatprep.subr.mxu0 0.0
      %946 = vmatpush1.msra.mxu0 %v359
      %947 = vmatprep.subr.mxu0 0.0
      %948 = vmatpush1.msra.mxu0 %v360
      %949 = vmatprep.subr.mxu0 0.0
      %950 = vmatpush1.msra.mxu0 %v361
      %951 = vmatprep.subr.mxu0 0.0
      %952 = vmatpush1.msra.mxu0 %v362
      %953 = vmatprep.subr.mxu0 0.0
      %954 = vmatpush1.msra.mxu0 0.0
      %955 = vmatprep.subr.mxu0 0.0
      %956 = vmatpush1.msra.mxu0 0.0
      %957 = vmatprep.subr.mxu0 0.0
      %958 = vmatpush1.msra.mxu0 0.0
      %959 = vmatprep.subr.mxu0 0.0
      %960 = vmatpush1.msra.mxu0 0.0
      %961 = vmatprep.subr.mxu0 0.0
      %962 = vmatpush1.msra.mxu0 0.0
      %963 = vmatprep.subr.mxu0 0.0
      %964 = vmatpush1.msra.mxu0 0.0
      %965 = vmatprep.subr.mxu0 0.0
      %966 = vmatpush1.msra.mxu0 0.0
      %967 = vmatprep.subr.mxu0 0.0
      %968 = vmatpush1.msra.mxu0 0.0
      %969 = vmatprep.subr.mxu0 0.0
      %970 = vmatpush1.msra.mxu0 0.0
      %971 = vmatprep.subr.mxu0 0.0
      %972 = vmatpush1.msra.mxu0 0.0
      %973 = vmatprep.subr.mxu0 0.0
      %974 = vmatpush1.msra.mxu0 0.0
      %975 = vmatprep.subr.mxu0 0.0
      %976 = vmatpush1.msra.mxu0 0.0
      %977 = vmatprep.subr.mxu0 0.0
      %978 = vmatpush1.msra.mxu0 0.0
      %979 = vmatprep.subr.mxu0 0.0
      %980 = vmatpush1.msra.mxu0 0.0
      %981 = vmatprep.subr.mxu0 0.0
      %982 = vmatpush1.msra.mxu0 0.0
      %983 = vmatprep.subr.mxu0 0.0
      %984 = vmatpush1.msra.mxu0 0.0
      %985 = vmatprep.mubr.f32.mxu0 0.0
      %986 = vmatmul.mubr.f32.gmra.mrb[0].mxu0 %v917
      %v987 = vpop.f32.mrb[0].mxu0
      %v988 = vadd.f32 %v443, %v987
      %v989 = vpop.f32.mrb[0].mxu0
      %990 = vdwg.mxu0
      %991 = vmax.xlane.f32.xlu0 %v988
      %v992 = vpop.xlane.xlu0 %991
      %v993 = vsub.f32 %v988, %v992
      %v994 = vmul.f32 %v993, 1.442695
      %v995 = vpow.pop %v994
      %996 = vadd.xlane.f32.xlu0 %v995
      %v997 = vpop.xlane.xlu0 %996
      %v998 = vlog2.pop %v997
      %v999 = vmul.f32 %v998, 0.6931472
      %v1000 = vsub.f32 %v993, %v999
      %s1001 = scalar_lea.vmem %s314, 24
      %1002 = vst [vmem:[%s1001] sm:$0xff] %v1000
      %s1003 = smul.u32 4, %s23
      %p1004 = scmp.lt.s32.totalorder %s1003, 7
      %s1005 = scalar_select %p1004, %s1003, 7
      %p1006 = scmp.lt.s32.totalorder %s22, 0
      %s1007 = scalar_select %p1006, %s22, 0
      %s1008 = sadd.s32 %s1007, %s1005
      %s1009 = smul.addr %s1008, 8
      %s1010 = scalar_lea.vmem %s5, %s1009
      %s1011 = smul.u32 4, %s23
      %p1012 = scmp.lt.s32.totalorder %s1011, 7
      %s1013 = scalar_select %p1012, %s1011, 7
      %p1014 = scmp.lt.s32.totalorder %s22, 0
      %s1015 = scalar_select %p1014, %s22, 0
      %s1016 = sadd.s32 %s1015, %s1013
      %s1017 = smul.addr %s1016, 8
      %s1018 = scalar_lea.vmem %s6, %s1017
      // Predicated region
      $region45: #{rnn_forward_seq.1} parent=39 // pred_check
        %p1019 = pneg %p167
      $region46: #{rnn_forward_seq.1} parent=39 // pred_check_branch
        %1021 = sbr.rel (%p1019) target = $region48
      $region47: #{rnn_forward_seq.1} parent=39 // pred_region
        %s1022 = smul.u32 4, %s23
      $region48: #{rnn_forward_seq.1} parent=39 // pred_fallthru
        _
      // Predicated region
      $region49: #{rnn_forward_seq.1} parent=39 // pred_check
        %p1023 = pneg %p195
      $region50: #{rnn_forward_seq.1} parent=39 // pred_check_branch
        %1025 = sbr.rel (%p1023) target = $region52
      $region51: #{rnn_forward_seq.1} parent=39 // pred_region
        %s1026 = smul.u32 4, %s23
      $region52: #{rnn_forward_seq.1} parent=39 // pred_fallthru
        _
    $region40: #{rnn_forward_seq.1} parent=5 // pred_fallthru
      _
    %p1027 = scmp.le.s32.totalorder 2, %s13
    // Predicated region
    $region53: #{rnn_forward_seq.1} parent=5 // pred_check
      %p1028 = pneg %p1027
    $region54: #{rnn_forward_seq.1} parent=5 // pred_check_branch
      %1030 = sbr.rel (%p1028) target = $region56
    $region55: #{rnn_forward_seq.1} parent=5 // pred_region
      %s1031 = ssub.s32 %s13, 2
      // Predicated region
      $region57: #{rnn_forward_seq.1} parent=55 // pred_check
        %p1032 = pneg %p173
      $region58: #{rnn_forward_seq.1} parent=55 // pred_check_branch
        %1034 = sbr.rel (%p1032) target = $region60
      $region59: #{rnn_forward_seq.1} parent=55 // pred_region
        %s1035 = smul.u32 4, %s25
        %p1036 = scmp.lt.s32.totalorder %s1035, 7
        %s1037 = scalar_select %p1036, %s1035, 7
        %p1038 = scmp.lt.s32.totalorder %s24, 0
        %s1039 = scalar_select %p1038, %s24, 0
        %s1040 = sadd.s32 %s1039, %s1037
        %s1041 = smul.addr %s1040, 8
        %s1042 = scalar_lea.vmem %s5, %s1041
      $region60: #{rnn_forward_seq.1} parent=55 // pred_fallthru
        _
      // Predicated region
      $region61: #{rnn_forward_seq.1} parent=55 // pred_check
        %p1043 = pneg %p201
      $region62: #{rnn_forward_seq.1} parent=55 // pred_check_branch
        %1045 = sbr.rel (%p1043) target = $region64
      $region63: #{rnn_forward_seq.1} parent=55 // pred_region
        %s1046 = smul.u32 4, %s25
        %p1047 = scmp.lt.s32.totalorder %s1046, 7
        %s1048 = scalar_select %p1047, %s1046, 7
        %p1049 = scmp.lt.s32.totalorder %s24, 0
        %s1050 = scalar_select %p1049, %s24, 0
        %s1051 = sadd.s32 %s1050, %s1048
        %s1052 = smul.addr %s1051, 8
        %s1053 = scalar_lea.vmem %s6, %s1052
      $region64: #{rnn_forward_seq.1} parent=55 // pred_fallthru
        _
    $region56: #{rnn_forward_seq.1} parent=5 // pred_fallthru
      _
  $region6: #{rnn_forward_seq.1} parent=0 // loop_footer
    %s17 = sadd.s32 1, %s13
  $region7: #{rnn_forward_seq.1} parent=0 // loop_footer_branch
    %12 = sbr.rel target = $region3
  $region8: #{rnn_forward_seq.1} parent=0 // loop_exit
    _

</llo_original>
